<compile_context>
chip_gen: v5e
topology: v5e:2x2
jax: 0.10.0
libtpu: 0.0.40
codegen_flags: <defaults>
</compile_context>

<pallas_src>
import functools

import jax
import jax.numpy as jnp
from jax import lax
from jax.experimental import pallas as pl
from jax.experimental.pallas import tpu as pltpu

EMBEDDING_DIM = 64
HIDDEN_DIM = 32
SUBLANE = 8                      # f32 sublane count
MAX_TIME_BLOCK = 32              # keep the full unroll of the recurrence sane
MAX_BATCH_BLOCK = 256            # fill MXU M-dim; >1 block enables v7x megacore
VMEM_DATA_BUDGET = 12 * 1024 * 1024   # conservative across v5e/v6e/v7x


def _round_up(x, m):
    return ((x + m - 1) // m) * m


def _lstm_chunk_kernel(emb_ref, wih_ref, whh_ref, b_ref, out_ref,
                       xg_sc, h_sc, c_sc, *, seq_len, time_block):
    """One grid step == one (batch_block, time_block) chunk of the LSTM.

    emb_ref : (TB, Bb, E)   embedded tokens, time-major
    wih_ref : (E, 4H)       input->gates weight, gate cols permuted [i,f,o,g]
    whh_ref : (H, 4H)       hidden->gates weight, same permutation
    b_ref   : (1, 4H)       b_ih + b_hh, same permutation
    out_ref : (Bb, H)       final hidden state for this batch block
    xg_sc   : (TB, Bb, 4H)  per-chunk precomputed input gates (VMEM scratch)
    h_sc/c_sc: (Bb, H)      recurrent state, persists across time chunks
    """
    H = HIDDEN_DIM
    chunk = pl.program_id(1)
    ragged = (seq_len % time_block) != 0        # static (trace-time) flag

    @pl.when(chunk == 0)
    def _():
        h_sc[...] = jnp.zeros_like(h_sc)
        c_sc[...] = jnp.zeros_like(c_sc)

    # ---- Hoisted resident tiles (loaded once per chunk). -------------------
    wih = wih_ref[...]          # (E, 4H)
    whh = whh_ref[...]          # (H, 4H)
    bias = b_ref[...]           # (1, 4H)

    # ---- Input projection: once per chunk, OFF the serial critical path. ---
    # Per-time-step 2D matmuls keep tiles clean; they are mutually independent
    # and amortized over the whole chunk, so they pipeline against the serial
    # recurrence below.
    tb = emb_ref.shape[0]
    for t in range(tb):
        xg_sc[t] = jnp.dot(emb_ref[t], wih,
                           preferred_element_type=jnp.float32) + bias

    # ---- Sequential recurrence: only h @ W_hh + nonlinearities remain. -----
    def step(i, carry):
        h, c = carry
        gates = xg_sc[i] + jnp.dot(h, whh, preferred_element_type=jnp.float32)
        # Gate columns pre-permuted in the wrapper to [i | f | o | g]:
        # one contiguous sigmoid over 3H lanes, one tanh over the last H lanes.
        sig = jax.nn.sigmoid(gates[:, :3 * H])
        g_g = jnp.tanh(gates[:, 3 * H:])
        i_g = sig[:, 0 * H:1 * H]
        f_g = sig[:, 1 * H:2 * H]
        o_g = sig[:, 2 * H:3 * H]
        c_new = f_g * c + i_g * g_g
        h_new = o_g * jnp.tanh(c_new)
        if ragged:
            # Freeze state on zero-padded tail time steps of the last chunk.
            keep = (chunk * time_block + i) < seq_len
            h_new = jnp.where(keep, h_new, h)
            c_new = jnp.where(keep, c_new, c)
        return h_new, c_new

    h_last, c_last = lax.fori_loop(0, time_block, step,
                                   (h_sc[...], c_sc[...]), unroll=True)
    h_sc[...] = h_last
    c_sc[...] = c_last

    @pl.when(chunk == pl.num_programs(1) - 1)
    def _():
        out_ref[...] = h_last.astype(out_ref.dtype)


def lstm_embedding_forward(x_idx, emb_table, w_ih, w_hh, b_ih, b_hh):
    """x_idx: (B, T) int32 token ids.  Returns (B, HIDDEN_DIM) f32 == output[:, -1, :]."""
    B, T = x_idx.shape
    E, H = EMBEDDING_DIM, HIDDEN_DIM
    G = 4 * H

    # ---- Batch blocking (MXU M-dim occupancy; megacore parallel axis). -----
    b_pad = _round_up(B, SUBLANE)
    if b_pad > MAX_BATCH_BLOCK:
        batch_block = MAX_BATCH_BLOCK
        b_pad = _round_up(b_pad, batch_block)
    else:
        batch_block = b_pad
    n_batch = b_pad // batch_block

    # ---- Time blocking under a generation-safe VMEM budget. ----------------
    # Per chunk time step: embedded input (double-buffered) + xg scratch.
    per_step_bytes = batch_block * (2 * E + G) * 4
    time_block = int(max(1, min(T, MAX_TIME_BLOCK,
                                VMEM_DATA_BUDGET // per_step_bytes)))
    n_chunks = pl.cdiv(T, time_block)
    t_pad = n_chunks * time_block

    # ---- Glue (plain JAX, fused by XLA) ------------------------------------
    # Embedding forward is a plain table gather; gather directly time-major so
    # no float transpose pass is needed.
    embedded = jnp.take(emb_table.astype(jnp.float32), x_idx.T, axis=0)  # (T,B,E)
    embedded = jnp.pad(embedded, ((0, t_pad - T), (0, b_pad - B), (0, 0)))

    # Permute gate columns from PyTorch's [i, f, g, o] to [i, f, o, g] so the
    # three sigmoid gates are lane-contiguous (0:96) and tanh is 96:128.
    perm = jnp.concatenate([jnp.arange(0, 2 * H),        # i, f
                            jnp.arange(3 * H, 4 * H),    # o
                            jnp.arange(2 * H, 3 * H)])   # g
    wih_t = w_ih[perm].T.astype(jnp.float32)             # (E, 4H)
    whh_t = w_hh[perm].T.astype(jnp.float32)             # (H, 4H)
    bias = (b_ih + b_hh)[perm].astype(jnp.float32).reshape(1, G)

    kernel = functools.partial(_lstm_chunk_kernel,
                               seq_len=T, time_block=time_block)

    # Explicit scoped-VMEM limit (keeps double buffering alive, avoids OOM on
    # v7x's halved VMEM / v5e's 16 MiB scoped default as batch grows).
    vmem_est = (2 * time_block * batch_block * E * 4        # emb, double-buffered
                + time_block * batch_block * G * 4          # xg scratch
                + 2 * (E + H + 1) * G * 4                   # weights + bias, x2
                + 4 * batch_block * H * 4                   # out (x2) + h + c
                + (2 << 20))                                # headroom
    vmem_limit = int(min(max(vmem_est, 16 << 20), 32 << 20))

    out = pl.pallas_call(
        kernel,
        out_shape=jax.ShapeDtypeStruct((b_pad, H), jnp.float32),
        grid_spec=pltpu.PrefetchScalarGridSpec(
            num_scalar_prefetch=0,
            grid=(n_batch, n_chunks),
            in_specs=[
                # (TB, Bb, E) chunk of embedded tokens, time-major.
                pl.BlockSpec((time_block, batch_block, E), lambda b, c: (c, b, 0)),
                # Weights / bias resident across all grid steps.
                pl.BlockSpec((E, G), lambda b, c: (0, 0)),
                pl.BlockSpec((H, G), lambda b, c: (0, 0)),
                pl.BlockSpec((1, G), lambda b, c: (0, 0)),
            ],
            out_specs=pl.BlockSpec((batch_block, H), lambda b, c: (b, 0)),
            scratch_shapes=[
                pltpu.VMEM((time_block, batch_block, G), jnp.float32),  # xg
                pltpu.VMEM((batch_block, H), jnp.float32),              # h
                pltpu.VMEM((batch_block, H), jnp.float32),              # c
            ],
        ),
        compiler_params=pltpu.CompilerParams(
            dimension_semantics=("parallel", "arbitrary"),  # batch ∥, time seq
            vmem_limit_bytes=vmem_limit,
        ),
    )(embedded, wih_t, whh_t, bias)
    return out[:B]


def _reference_lstm_last(x_idx, emb_table, w_ih, w_hh, b_ih, b_hh):
    """Pure-JAX reference (lax.scan LSTM, PyTorch gate order) for sanity check."""
    H = HIDDEN_DIM
    embedded = jnp.take(emb_table, x_idx, axis=0)           # (B, T, E)
    B = embedded.shape[0]

    def step(carry, x_t):
        h, c = carry
        gates = x_t @ w_ih.T + b_ih + h @ w_hh.T + b_hh
        i = jax.nn.sigmoid(gates[:, 0 * H:1 * H])
        f = jax.nn.sigmoid(gates[:, 1 * H:2 * H])
        g = jnp.tanh(gates[:, 2 * H:3 * H])
        o = jax.nn.sigmoid(gates[:, 3 * H:4 * H])
        c = f * c + i * g
        h = o * jnp.tanh(c)
        return (h, c), h

    h0 = jnp.zeros((B, H), jnp.float32)
    c0 = jnp.zeros((B, H), jnp.float32)
    (h_last, _), _ = jax.lax.scan(step, (h0, c0),
                                  jnp.transpose(embedded, (1, 0, 2)))
    return h_last


if __name__ == "__main__":
    key = jax.random.PRNGKey(0)
    k_emb, k_wih, k_whh, k_bih, k_bhh, k_x = jax.random.split(key, 6)

    vocab_size = 50
    B, T = 2, 8
    E, H = EMBEDDING_DIM, HIDDEN_DIM

    # Deterministic synthetic parameters (no checkpoint load).
    emb_table = jax.random.normal(k_emb, (vocab_size, E), jnp.float32) * 0.1
    w_ih = jax.random.normal(k_wih, (4 * H, E), jnp.float32) * 0.1
    w_hh = jax.random.normal(k_whh, (4 * H, H), jnp.float32) * 0.1
    b_ih = jax.random.normal(k_bih, (4 * H,), jnp.float32) * 0.1
    b_hh = jax.random.normal(k_bhh, (4 * H,), jnp.float32) * 0.1

    x = jax.random.randint(k_x, (B, T), 0, vocab_size, dtype=jnp.int32)

    fwd = jax.jit(lstm_embedding_forward)
    out = jax.block_until_ready(fwd(x, emb_table, w_ih, w_hh, b_ih, b_hh))

    ref = _reference_lstm_last(x, emb_table, w_ih, w_hh, b_ih, b_hh)
    assert out.shape == (B, H)
    assert jnp.allclose(out, ref, atol=1e-4, rtol=1e-4), \
        float(jnp.max(jnp.abs(out - ref)))

    print("KERNEL_OK")
</pallas_src>

<mosaic_0001>
module attributes {stable_mosaic.version = 11 : i64} {
  func.func @_lstm_chunk_kernel(%arg0: i32, %arg1: i32, %arg2: memref<8x8x64xf32, #tpu.memory_space<vmem>>, %arg3: memref<64x128xf32, #tpu.memory_space<vmem>>, %arg4: memref<32x128xf32, #tpu.memory_space<vmem>>, %arg5: memref<1x128xf32, #tpu.memory_space<vmem>>, %arg6: memref<8x32xf32, #tpu.memory_space<vmem>>, %arg7: memref<8x8x128xf32, #tpu.memory_space<vmem>>, %arg8: memref<8x32xf32, #tpu.memory_space<vmem>>, %arg9: memref<8x32xf32, #tpu.memory_space<vmem>>) attributes {dimension_semantics = [#tpu.dimension_semantics<parallel>, #tpu.dimension_semantics<arbitrary>], iteration_bounds = array<i64: 1, 1>, scalar_prefetch = 0 : i64, scratch_operands = 3 : i64, tpu.core_type = #tpu.core_type<tc>, window_params = [{transform_indices = @transform_0, window_bounds = array<i64: 8, 8, 64>}, {pipeline_mode = #tpu.pipeline_mode<synchronous>, transform_indices = @transform_1, window_bounds = array<i64: 64, 128>}, {pipeline_mode = #tpu.pipeline_mode<synchronous>, transform_indices = @transform_2, window_bounds = array<i64: 32, 128>}, {pipeline_mode = #tpu.pipeline_mode<synchronous>, transform_indices = @transform_3, window_bounds = array<i64: 1, 128>}, {transform_indices = @transform_4, window_bounds = array<i64: 8, 32>}]} {
    %c0_i32 = arith.constant 0 : i32
    %0 = arith.cmpi eq, %arg1, %c0_i32 : i32
    %1 = arith.extui %0 : i1 to i32
    %c0_i32_0 = arith.constant 0 : i32
    %2 = arith.cmpi ne, %1, %c0_i32_0 : i32
    scf.if %2 {
      %cst_97 = arith.constant 0.000000e+00 : f32
      %245 = vector.broadcast %cst_97 : f32 to vector<8x32xf32>
      %c0_98 = arith.constant 0 : index
      %c0_99 = arith.constant 0 : index
      %246 = vector.load %arg8[%c0_98, %c0_99] : memref<8x32xf32, #tpu.memory_space<vmem>>, vector<8x32xf32>
      tpu.vector_store %arg8[%c0_98, %c0_99], %245 {strides = array<i32>} : memref<8x32xf32, #tpu.memory_space<vmem>>, vector<8x32xf32>,
      %cst_100 = arith.constant 0.000000e+00 : f32
      %247 = vector.broadcast %cst_100 : f32 to vector<8x32xf32>
      %c0_101 = arith.constant 0 : index
      %c0_102 = arith.constant 0 : index
      %248 = vector.load %arg9[%c0_101, %c0_102] : memref<8x32xf32, #tpu.memory_space<vmem>>, vector<8x32xf32>
      tpu.vector_store %arg9[%c0_101, %c0_102], %247 {strides = array<i32>} : memref<8x32xf32, #tpu.memory_space<vmem>>, vector<8x32xf32>,
    } else {
    }
    %c0 = arith.constant 0 : index
    %c0_1 = arith.constant 0 : index
    %3 = vector.load %arg3[%c0, %c0_1] : memref<64x128xf32, #tpu.memory_space<vmem>>, vector<64x128xf32>
    %c0_2 = arith.constant 0 : index
    %c0_3 = arith.constant 0 : index
    %4 = vector.load %arg4[%c0_2, %c0_3] : memref<32x128xf32, #tpu.memory_space<vmem>>, vector<32x128xf32>
    %c0_4 = arith.constant 0 : index
    %c0_5 = arith.constant 0 : index
    %5 = vector.load %arg5[%c0_4, %c0_5] : memref<1x128xf32, #tpu.memory_space<vmem>>, vector<1x128xf32>
    %c0_6 = arith.constant 0 : index
    %c0_7 = arith.constant 0 : index
    %c0_8 = arith.constant 0 : index
    %6 = vector.load %arg2[%c0_6, %c0_7, %c0_8] : memref<8x8x64xf32, #tpu.memory_space<vmem>>, vector<1x8x64xf32>
    %7 = vector.shape_cast %6 : vector<1x8x64xf32> to vector<8x64xf32>
    %cst = arith.constant dense<0.000000e+00> : vector<8x128xf32>
    %8 = tpu.matmul %7, %3, %cst {dimension_numbers = #tpu.dot_dimension_numbers<[1], [0], [0], [1], [0, 0, 1, 1], [], []>} : vector<8x64xf32>, vector<64x128xf32>, vector<8x128xf32> -> vector<8x128xf32>
    %9 = vector.broadcast %5 : vector<1x128xf32> to vector<8x128xf32>
    %10 = arith.addf %8, %9 : vector<8x128xf32>
    %c0_9 = arith.constant 0 : index
    %c0_10 = arith.constant 0 : index
    %c0_11 = arith.constant 0 : index
    %11 = vector.load %arg7[%c0_9, %c0_10, %c0_11] : memref<8x8x128xf32, #tpu.memory_space<vmem>>, vector<1x8x128xf32>
    %12 = vector.shape_cast %11 : vector<1x8x128xf32> to vector<8x128xf32>
    %13 = vector.shape_cast %10 : vector<8x128xf32> to vector<1x8x128xf32>
    tpu.vector_store %arg7[%c0_9, %c0_10, %c0_11], %13 {strides = array<i32>} : memref<8x8x128xf32, #tpu.memory_space<vmem>>, vector<1x8x128xf32>,
    %c1 = arith.constant 1 : index
    %c0_12 = arith.constant 0 : index
    %c0_13 = arith.constant 0 : index
    %14 = vector.load %arg2[%c1, %c0_12, %c0_13] : memref<8x8x64xf32, #tpu.memory_space<vmem>>, vector<1x8x64xf32>
    %15 = vector.shape_cast %14 : vector<1x8x64xf32> to vector<8x64xf32>
    %cst_14 = arith.constant dense<0.000000e+00> : vector<8x128xf32>
    %16 = tpu.matmul %15, %3, %cst_14 {dimension_numbers = #tpu.dot_dimension_numbers<[1], [0], [0], [1], [0, 0, 1, 1], [], []>} : vector<8x64xf32>, vector<64x128xf32>, vector<8x128xf32> -> vector<8x128xf32>
    %17 = vector.broadcast %5 : vector<1x128xf32> to vector<8x128xf32>
    %18 = arith.addf %16, %17 : vector<8x128xf32>
    %c1_15 = arith.constant 1 : index
    %c0_16 = arith.constant 0 : index
    %c0_17 = arith.constant 0 : index
    %19 = vector.load %arg7[%c1_15, %c0_16, %c0_17] : memref<8x8x128xf32, #tpu.memory_space<vmem>>, vector<1x8x128xf32>
    %20 = vector.shape_cast %19 : vector<1x8x128xf32> to vector<8x128xf32>
    %21 = vector.shape_cast %18 : vector<8x128xf32> to vector<1x8x128xf32>
    tpu.vector_store %arg7[%c1_15, %c0_16, %c0_17], %21 {strides = array<i32>} : memref<8x8x128xf32, #tpu.memory_space<vmem>>, vector<1x8x128xf32>,
    %c2 = arith.constant 2 : index
    %c0_18 = arith.constant 0 : index
    %c0_19 = arith.constant 0 : index
    %22 = vector.load %arg2[%c2, %c0_18, %c0_19] : memref<8x8x64xf32, #tpu.memory_space<vmem>>, vector<1x8x64xf32>
    %23 = vector.shape_cast %22 : vector<1x8x64xf32> to vector<8x64xf32>
    %cst_20 = arith.constant dense<0.000000e+00> : vector<8x128xf32>
    %24 = tpu.matmul %23, %3, %cst_20 {dimension_numbers = #tpu.dot_dimension_numbers<[1], [0], [0], [1], [0, 0, 1, 1], [], []>} : vector<8x64xf32>, vector<64x128xf32>, vector<8x128xf32> -> vector<8x128xf32>
    %25 = vector.broadcast %5 : vector<1x128xf32> to vector<8x128xf32>
    %26 = arith.addf %24, %25 : vector<8x128xf32>
    %c2_21 = arith.constant 2 : index
    %c0_22 = arith.constant 0 : index
    %c0_23 = arith.constant 0 : index
    %27 = vector.load %arg7[%c2_21, %c0_22, %c0_23] : memref<8x8x128xf32, #tpu.memory_space<vmem>>, vector<1x8x128xf32>
    %28 = vector.shape_cast %27 : vector<1x8x128xf32> to vector<8x128xf32>
    %29 = vector.shape_cast %26 : vector<8x128xf32> to vector<1x8x128xf32>
    tpu.vector_store %arg7[%c2_21, %c0_22, %c0_23], %29 {strides = array<i32>} : memref<8x8x128xf32, #tpu.memory_space<vmem>>, vector<1x8x128xf32>,
    %c3 = arith.constant 3 : index
    %c0_24 = arith.constant 0 : index
    %c0_25 = arith.constant 0 : index
    %30 = vector.load %arg2[%c3, %c0_24, %c0_25] : memref<8x8x64xf32, #tpu.memory_space<vmem>>, vector<1x8x64xf32>
    %31 = vector.shape_cast %30 : vector<1x8x64xf32> to vector<8x64xf32>
    %cst_26 = arith.constant dense<0.000000e+00> : vector<8x128xf32>
    %32 = tpu.matmul %31, %3, %cst_26 {dimension_numbers = #tpu.dot_dimension_numbers<[1], [0], [0], [1], [0, 0, 1, 1], [], []>} : vector<8x64xf32>, vector<64x128xf32>, vector<8x128xf32> -> vector<8x128xf32>
    %33 = vector.broadcast %5 : vector<1x128xf32> to vector<8x128xf32>
    %34 = arith.addf %32, %33 : vector<8x128xf32>
    %c3_27 = arith.constant 3 : index
    %c0_28 = arith.constant 0 : index
    %c0_29 = arith.constant 0 : index
    %35 = vector.load %arg7[%c3_27, %c0_28, %c0_29] : memref<8x8x128xf32, #tpu.memory_space<vmem>>, vector<1x8x128xf32>
    %36 = vector.shape_cast %35 : vector<1x8x128xf32> to vector<8x128xf32>
    %37 = vector.shape_cast %34 : vector<8x128xf32> to vector<1x8x128xf32>
    tpu.vector_store %arg7[%c3_27, %c0_28, %c0_29], %37 {strides = array<i32>} : memref<8x8x128xf32, #tpu.memory_space<vmem>>, vector<1x8x128xf32>,
    %c4 = arith.constant 4 : index
    %c0_30 = arith.constant 0 : index
    %c0_31 = arith.constant 0 : index
    %38 = vector.load %arg2[%c4, %c0_30, %c0_31] : memref<8x8x64xf32, #tpu.memory_space<vmem>>, vector<1x8x64xf32>
    %39 = vector.shape_cast %38 : vector<1x8x64xf32> to vector<8x64xf32>
    %cst_32 = arith.constant dense<0.000000e+00> : vector<8x128xf32>
    %40 = tpu.matmul %39, %3, %cst_32 {dimension_numbers = #tpu.dot_dimension_numbers<[1], [0], [0], [1], [0, 0, 1, 1], [], []>} : vector<8x64xf32>, vector<64x128xf32>, vector<8x128xf32> -> vector<8x128xf32>
    %41 = vector.broadcast %5 : vector<1x128xf32> to vector<8x128xf32>
    %42 = arith.addf %40, %41 : vector<8x128xf32>
    %c4_33 = arith.constant 4 : index
    %c0_34 = arith.constant 0 : index
    %c0_35 = arith.constant 0 : index
    %43 = vector.load %arg7[%c4_33, %c0_34, %c0_35] : memref<8x8x128xf32, #tpu.memory_space<vmem>>, vector<1x8x128xf32>
    %44 = vector.shape_cast %43 : vector<1x8x128xf32> to vector<8x128xf32>
    %45 = vector.shape_cast %42 : vector<8x128xf32> to vector<1x8x128xf32>
    tpu.vector_store %arg7[%c4_33, %c0_34, %c0_35], %45 {strides = array<i32>} : memref<8x8x128xf32, #tpu.memory_space<vmem>>, vector<1x8x128xf32>,
    %c5 = arith.constant 5 : index
    %c0_36 = arith.constant 0 : index
    %c0_37 = arith.constant 0 : index
    %46 = vector.load %arg2[%c5, %c0_36, %c0_37] : memref<8x8x64xf32, #tpu.memory_space<vmem>>, vector<1x8x64xf32>
    %47 = vector.shape_cast %46 : vector<1x8x64xf32> to vector<8x64xf32>
    %cst_38 = arith.constant dense<0.000000e+00> : vector<8x128xf32>
    %48 = tpu.matmul %47, %3, %cst_38 {dimension_numbers = #tpu.dot_dimension_numbers<[1], [0], [0], [1], [0, 0, 1, 1], [], []>} : vector<8x64xf32>, vector<64x128xf32>, vector<8x128xf32> -> vector<8x128xf32>
    %49 = vector.broadcast %5 : vector<1x128xf32> to vector<8x128xf32>
    %50 = arith.addf %48, %49 : vector<8x128xf32>
    %c5_39 = arith.constant 5 : index
    %c0_40 = arith.constant 0 : index
    %c0_41 = arith.constant 0 : index
    %51 = vector.load %arg7[%c5_39, %c0_40, %c0_41] : memref<8x8x128xf32, #tpu.memory_space<vmem>>, vector<1x8x128xf32>
    %52 = vector.shape_cast %51 : vector<1x8x128xf32> to vector<8x128xf32>
    %53 = vector.shape_cast %50 : vector<8x128xf32> to vector<1x8x128xf32>
    tpu.vector_store %arg7[%c5_39, %c0_40, %c0_41], %53 {strides = array<i32>} : memref<8x8x128xf32, #tpu.memory_space<vmem>>, vector<1x8x128xf32>,
    %c6 = arith.constant 6 : index
    %c0_42 = arith.constant 0 : index
    %c0_43 = arith.constant 0 : index
    %54 = vector.load %arg2[%c6, %c0_42, %c0_43] : memref<8x8x64xf32, #tpu.memory_space<vmem>>, vector<1x8x64xf32>
    %55 = vector.shape_cast %54 : vector<1x8x64xf32> to vector<8x64xf32>
    %cst_44 = arith.constant dense<0.000000e+00> : vector<8x128xf32>
    %56 = tpu.matmul %55, %3, %cst_44 {dimension_numbers = #tpu.dot_dimension_numbers<[1], [0], [0], [1], [0, 0, 1, 1], [], []>} : vector<8x64xf32>, vector<64x128xf32>, vector<8x128xf32> -> vector<8x128xf32>
    %57 = vector.broadcast %5 : vector<1x128xf32> to vector<8x128xf32>
    %58 = arith.addf %56, %57 : vector<8x128xf32>
    %c6_45 = arith.constant 6 : index
    %c0_46 = arith.constant 0 : index
    %c0_47 = arith.constant 0 : index
    %59 = vector.load %arg7[%c6_45, %c0_46, %c0_47] : memref<8x8x128xf32, #tpu.memory_space<vmem>>, vector<1x8x128xf32>
    %60 = vector.shape_cast %59 : vector<1x8x128xf32> to vector<8x128xf32>
    %61 = vector.shape_cast %58 : vector<8x128xf32> to vector<1x8x128xf32>
    tpu.vector_store %arg7[%c6_45, %c0_46, %c0_47], %61 {strides = array<i32>} : memref<8x8x128xf32, #tpu.memory_space<vmem>>, vector<1x8x128xf32>,
    %c7 = arith.constant 7 : index
    %c0_48 = arith.constant 0 : index
    %c0_49 = arith.constant 0 : index
    %62 = vector.load %arg2[%c7, %c0_48, %c0_49] : memref<8x8x64xf32, #tpu.memory_space<vmem>>, vector<1x8x64xf32>
    %63 = vector.shape_cast %62 : vector<1x8x64xf32> to vector<8x64xf32>
    %cst_50 = arith.constant dense<0.000000e+00> : vector<8x128xf32>
    %64 = tpu.matmul %63, %3, %cst_50 {dimension_numbers = #tpu.dot_dimension_numbers<[1], [0], [0], [1], [0, 0, 1, 1], [], []>} : vector<8x64xf32>, vector<64x128xf32>, vector<8x128xf32> -> vector<8x128xf32>
    %65 = vector.broadcast %5 : vector<1x128xf32> to vector<8x128xf32>
    %66 = arith.addf %64, %65 : vector<8x128xf32>
    %c7_51 = arith.constant 7 : index
    %c0_52 = arith.constant 0 : index
    %c0_53 = arith.constant 0 : index
    %67 = vector.load %arg7[%c7_51, %c0_52, %c0_53] : memref<8x8x128xf32, #tpu.memory_space<vmem>>, vector<1x8x128xf32>
    %68 = vector.shape_cast %67 : vector<1x8x128xf32> to vector<8x128xf32>
    %69 = vector.shape_cast %66 : vector<8x128xf32> to vector<1x8x128xf32>
    tpu.vector_store %arg7[%c7_51, %c0_52, %c0_53], %69 {strides = array<i32>} : memref<8x8x128xf32, #tpu.memory_space<vmem>>, vector<1x8x128xf32>,
    %c0_54 = arith.constant 0 : index
    %c0_55 = arith.constant 0 : index
    %70 = vector.load %arg8[%c0_54, %c0_55] : memref<8x32xf32, #tpu.memory_space<vmem>>, vector<8x32xf32>
    %c0_56 = arith.constant 0 : index
    %c0_57 = arith.constant 0 : index
    %71 = vector.load %arg9[%c0_56, %c0_57] : memref<8x32xf32, #tpu.memory_space<vmem>>, vector<8x32xf32>
    %c0_i32_58 = arith.constant 0 : i32
    %72 = arith.index_cast %c0_i32_58 : i32 to index
    %c0_59 = arith.constant 0 : index
    %c0_60 = arith.constant 0 : index
    %73 = vector.load %arg7[%72, %c0_59, %c0_60] : memref<8x8x128xf32, #tpu.memory_space<vmem>>, vector<1x8x128xf32>
    %74 = vector.shape_cast %73 : vector<1x8x128xf32> to vector<8x128xf32>
    %cst_61 = arith.constant dense<0.000000e+00> : vector<8x128xf32>
    %75 = tpu.matmul %70, %4, %cst_61 {dimension_numbers = #tpu.dot_dimension_numbers<[1], [0], [0], [1], [0, 0, 1, 1], [], []>} : vector<8x32xf32>, vector<32x128xf32>, vector<8x128xf32> -> vector<8x128xf32>
    %76 = arith.addf %74, %75 : vector<8x128xf32>
    %77 = vector.extract_strided_slice %76 {offsets = [0, 0], sizes = [8, 96], strides = [1, 1]} : vector<8x128xf32> to vector<8x96xf32>
    %78 = arith.negf %77 : vector<8x96xf32>
    %79 = math.exp %78 : vector<8x96xf32>
    %cst_62 = arith.constant 1.000000e+00 : f32
    %80 = vector.broadcast %cst_62 : f32 to vector<8x96xf32>
    %81 = arith.addf %80, %79 : vector<8x96xf32>
    %82 = arith.divf %80, %81 : vector<8x96xf32>
    %83 = vector.extract_strided_slice %76 {offsets = [0, 96], sizes = [8, 32], strides = [1, 1]} : vector<8x128xf32> to vector<8x32xf32>
    %84 = math.tanh %83 : vector<8x32xf32>
    %85 = vector.extract_strided_slice %82 {offsets = [0, 0], sizes = [8, 32], strides = [1, 1]} : vector<8x96xf32> to vector<8x32xf32>
    %86 = vector.extract_strided_slice %82 {offsets = [0, 32], sizes = [8, 32], strides = [1, 1]} : vector<8x96xf32> to vector<8x32xf32>
    %87 = vector.extract_strided_slice %82 {offsets = [0, 64], sizes = [8, 32], strides = [1, 1]} : vector<8x96xf32> to vector<8x32xf32>
    %88 = arith.mulf %86, %71 : vector<8x32xf32>
    %89 = arith.mulf %85, %84 : vector<8x32xf32>
    %90 = arith.addf %88, %89 : vector<8x32xf32>
    %91 = math.tanh %90 : vector<8x32xf32>
    %92 = arith.mulf %87, %91 : vector<8x32xf32>
    %c1_i32 = arith.constant 1 : i32
    %93 = arith.index_cast %c1_i32 : i32 to index
    %c0_63 = arith.constant 0 : index
    %c0_64 = arith.constant 0 : index
    %94 = vector.load %arg7[%93, %c0_63, %c0_64] : memref<8x8x128xf32, #tpu.memory_space<vmem>>, vector<1x8x128xf32>
    %95 = vector.shape_cast %94 : vector<1x8x128xf32> to vector<8x128xf32>
    %cst_65 = arith.constant dense<0.000000e+00> : vector<8x128xf32>
    %96 = tpu.matmul %92, %4, %cst_65 {dimension_numbers = #tpu.dot_dimension_numbers<[1], [0], [0], [1], [0, 0, 1, 1], [], []>} : vector<8x32xf32>, vector<32x128xf32>, vector<8x128xf32> -> vector<8x128xf32>
    %97 = arith.addf %95, %96 : vector<8x128xf32>
    %98 = vector.extract_strided_slice %97 {offsets = [0, 0], sizes = [8, 96], strides = [1, 1]} : vector<8x128xf32> to vector<8x96xf32>
    %99 = arith.negf %98 : vector<8x96xf32>
    %100 = math.exp %99 : vector<8x96xf32>
    %cst_66 = arith.constant 1.000000e+00 : f32
    %101 = vector.broadcast %cst_66 : f32 to vector<8x96xf32>
    %102 = arith.addf %101, %100 : vector<8x96xf32>
    %103 = arith.divf %101, %102 : vector<8x96xf32>
    %104 = vector.extract_strided_slice %97 {offsets = [0, 96], sizes = [8, 32], strides = [1, 1]} : vector<8x128xf32> to vector<8x32xf32>
    %105 = math.tanh %104 : vector<8x32xf32>
    %106 = vector.extract_strided_slice %103 {offsets = [0, 0], sizes = [8, 32], strides = [1, 1]} : vector<8x96xf32> to vector<8x32xf32>
    %107 = vector.extract_strided_slice %103 {offsets = [0, 32], sizes = [8, 32], strides = [1, 1]} : vector<8x96xf32> to vector<8x32xf32>
    %108 = vector.extract_strided_slice %103 {offsets = [0, 64], sizes = [8, 32], strides = [1, 1]} : vector<8x96xf32> to vector<8x32xf32>
    %109 = arith.mulf %107, %90 : vector<8x32xf32>
    %110 = arith.mulf %106, %105 : vector<8x32xf32>
    %111 = arith.addf %109, %110 : vector<8x32xf32>
    %112 = math.tanh %111 : vector<8x32xf32>
    %113 = arith.mulf %108, %112 : vector<8x32xf32>
    %c2_i32 = arith.constant 2 : i32
    %114 = arith.index_cast %c2_i32 : i32 to index
    %c0_67 = arith.constant 0 : index
    %c0_68 = arith.constant 0 : index
    %115 = vector.load %arg7[%114, %c0_67, %c0_68] : memref<8x8x128xf32, #tpu.memory_space<vmem>>, vector<1x8x128xf32>
    %116 = vector.shape_cast %115 : vector<1x8x128xf32> to vector<8x128xf32>
    %cst_69 = arith.constant dense<0.000000e+00> : vector<8x128xf32>
    %117 = tpu.matmul %113, %4, %cst_69 {dimension_numbers = #tpu.dot_dimension_numbers<[1], [0], [0], [1], [0, 0, 1, 1], [], []>} : vector<8x32xf32>, vector<32x128xf32>, vector<8x128xf32> -> vector<8x128xf32>
    %118 = arith.addf %116, %117 : vector<8x128xf32>
    %119 = vector.extract_strided_slice %118 {offsets = [0, 0], sizes = [8, 96], strides = [1, 1]} : vector<8x128xf32> to vector<8x96xf32>
    %120 = arith.negf %119 : vector<8x96xf32>
    %121 = math.exp %120 : vector<8x96xf32>
    %cst_70 = arith.constant 1.000000e+00 : f32
    %122 = vector.broadcast %cst_70 : f32 to vector<8x96xf32>
    %123 = arith.addf %122, %121 : vector<8x96xf32>
    %124 = arith.divf %122, %123 : vector<8x96xf32>
    %125 = vector.extract_strided_slice %118 {offsets = [0, 96], sizes = [8, 32], strides = [1, 1]} : vector<8x128xf32> to vector<8x32xf32>
    %126 = math.tanh %125 : vector<8x32xf32>
    %127 = vector.extract_strided_slice %124 {offsets = [0, 0], sizes = [8, 32], strides = [1, 1]} : vector<8x96xf32> to vector<8x32xf32>
    %128 = vector.extract_strided_slice %124 {offsets = [0, 32], sizes = [8, 32], strides = [1, 1]} : vector<8x96xf32> to vector<8x32xf32>
    %129 = vector.extract_strided_slice %124 {offsets = [0, 64], sizes = [8, 32], strides = [1, 1]} : vector<8x96xf32> to vector<8x32xf32>
    %130 = arith.mulf %128, %111 : vector<8x32xf32>
    %131 = arith.mulf %127, %126 : vector<8x32xf32>
    %132 = arith.addf %130, %131 : vector<8x32xf32>
    %133 = math.tanh %132 : vector<8x32xf32>
    %134 = arith.mulf %129, %133 : vector<8x32xf32>
    %c3_i32 = arith.constant 3 : i32
    %135 = arith.index_cast %c3_i32 : i32 to index
    %c0_71 = arith.constant 0 : index
    %c0_72 = arith.constant 0 : index
    %136 = vector.load %arg7[%135, %c0_71, %c0_72] : memref<8x8x128xf32, #tpu.memory_space<vmem>>, vector<1x8x128xf32>
    %137 = vector.shape_cast %136 : vector<1x8x128xf32> to vector<8x128xf32>
    %cst_73 = arith.constant dense<0.000000e+00> : vector<8x128xf32>
    %138 = tpu.matmul %134, %4, %cst_73 {dimension_numbers = #tpu.dot_dimension_numbers<[1], [0], [0], [1], [0, 0, 1, 1], [], []>} : vector<8x32xf32>, vector<32x128xf32>, vector<8x128xf32> -> vector<8x128xf32>
    %139 = arith.addf %137, %138 : vector<8x128xf32>
    %140 = vector.extract_strided_slice %139 {offsets = [0, 0], sizes = [8, 96], strides = [1, 1]} : vector<8x128xf32> to vector<8x96xf32>
    %141 = arith.negf %140 : vector<8x96xf32>
    %142 = math.exp %141 : vector<8x96xf32>
    %cst_74 = arith.constant 1.000000e+00 : f32
    %143 = vector.broadcast %cst_74 : f32 to vector<8x96xf32>
    %144 = arith.addf %143, %142 : vector<8x96xf32>
    %145 = arith.divf %143, %144 : vector<8x96xf32>
    %146 = vector.extract_strided_slice %139 {offsets = [0, 96], sizes = [8, 32], strides = [1, 1]} : vector<8x128xf32> to vector<8x32xf32>
    %147 = math.tanh %146 : vector<8x32xf32>
    %148 = vector.extract_strided_slice %145 {offsets = [0, 0], sizes = [8, 32], strides = [1, 1]} : vector<8x96xf32> to vector<8x32xf32>
    %149 = vector.extract_strided_slice %145 {offsets = [0, 32], sizes = [8, 32], strides = [1, 1]} : vector<8x96xf32> to vector<8x32xf32>
    %150 = vector.extract_strided_slice %145 {offsets = [0, 64], sizes = [8, 32], strides = [1, 1]} : vector<8x96xf32> to vector<8x32xf32>
    %151 = arith.mulf %149, %132 : vector<8x32xf32>
    %152 = arith.mulf %148, %147 : vector<8x32xf32>
    %153 = arith.addf %151, %152 : vector<8x32xf32>
    %154 = math.tanh %153 : vector<8x32xf32>
    %155 = arith.mulf %150, %154 : vector<8x32xf32>
    %c4_i32 = arith.constant 4 : i32
    %156 = arith.index_cast %c4_i32 : i32 to index
    %c0_75 = arith.constant 0 : index
    %c0_76 = arith.constant 0 : index
    %157 = vector.load %arg7[%156, %c0_75, %c0_76] : memref<8x8x128xf32, #tpu.memory_space<vmem>>, vector<1x8x128xf32>
    %158 = vector.shape_cast %157 : vector<1x8x128xf32> to vector<8x128xf32>
    %cst_77 = arith.constant dense<0.000000e+00> : vector<8x128xf32>
    %159 = tpu.matmul %155, %4, %cst_77 {dimension_numbers = #tpu.dot_dimension_numbers<[1], [0], [0], [1], [0, 0, 1, 1], [], []>} : vector<8x32xf32>, vector<32x128xf32>, vector<8x128xf32> -> vector<8x128xf32>
    %160 = arith.addf %158, %159 : vector<8x128xf32>
    %161 = vector.extract_strided_slice %160 {offsets = [0, 0], sizes = [8, 96], strides = [1, 1]} : vector<8x128xf32> to vector<8x96xf32>
    %162 = arith.negf %161 : vector<8x96xf32>
    %163 = math.exp %162 : vector<8x96xf32>
    %cst_78 = arith.constant 1.000000e+00 : f32
    %164 = vector.broadcast %cst_78 : f32 to vector<8x96xf32>
    %165 = arith.addf %164, %163 : vector<8x96xf32>
    %166 = arith.divf %164, %165 : vector<8x96xf32>
    %167 = vector.extract_strided_slice %160 {offsets = [0, 96], sizes = [8, 32], strides = [1, 1]} : vector<8x128xf32> to vector<8x32xf32>
    %168 = math.tanh %167 : vector<8x32xf32>
    %169 = vector.extract_strided_slice %166 {offsets = [0, 0], sizes = [8, 32], strides = [1, 1]} : vector<8x96xf32> to vector<8x32xf32>
    %170 = vector.extract_strided_slice %166 {offsets = [0, 32], sizes = [8, 32], strides = [1, 1]} : vector<8x96xf32> to vector<8x32xf32>
    %171 = vector.extract_strided_slice %166 {offsets = [0, 64], sizes = [8, 32], strides = [1, 1]} : vector<8x96xf32> to vector<8x32xf32>
    %172 = arith.mulf %170, %153 : vector<8x32xf32>
    %173 = arith.mulf %169, %168 : vector<8x32xf32>
    %174 = arith.addf %172, %173 : vector<8x32xf32>
    %175 = math.tanh %174 : vector<8x32xf32>
    %176 = arith.mulf %171, %175 : vector<8x32xf32>
    %c5_i32 = arith.constant 5 : i32
    %177 = arith.index_cast %c5_i32 : i32 to index
    %c0_79 = arith.constant 0 : index
    %c0_80 = arith.constant 0 : index
    %178 = vector.load %arg7[%177, %c0_79, %c0_80] : memref<8x8x128xf32, #tpu.memory_space<vmem>>, vector<1x8x128xf32>
    %179 = vector.shape_cast %178 : vector<1x8x128xf32> to vector<8x128xf32>
    %cst_81 = arith.constant dense<0.000000e+00> : vector<8x128xf32>
    %180 = tpu.matmul %176, %4, %cst_81 {dimension_numbers = #tpu.dot_dimension_numbers<[1], [0], [0], [1], [0, 0, 1, 1], [], []>} : vector<8x32xf32>, vector<32x128xf32>, vector<8x128xf32> -> vector<8x128xf32>
    %181 = arith.addf %179, %180 : vector<8x128xf32>
    %182 = vector.extract_strided_slice %181 {offsets = [0, 0], sizes = [8, 96], strides = [1, 1]} : vector<8x128xf32> to vector<8x96xf32>
    %183 = arith.negf %182 : vector<8x96xf32>
    %184 = math.exp %183 : vector<8x96xf32>
    %cst_82 = arith.constant 1.000000e+00 : f32
    %185 = vector.broadcast %cst_82 : f32 to vector<8x96xf32>
    %186 = arith.addf %185, %184 : vector<8x96xf32>
    %187 = arith.divf %185, %186 : vector<8x96xf32>
    %188 = vector.extract_strided_slice %181 {offsets = [0, 96], sizes = [8, 32], strides = [1, 1]} : vector<8x128xf32> to vector<8x32xf32>
    %189 = math.tanh %188 : vector<8x32xf32>
    %190 = vector.extract_strided_slice %187 {offsets = [0, 0], sizes = [8, 32], strides = [1, 1]} : vector<8x96xf32> to vector<8x32xf32>
    %191 = vector.extract_strided_slice %187 {offsets = [0, 32], sizes = [8, 32], strides = [1, 1]} : vector<8x96xf32> to vector<8x32xf32>
    %192 = vector.extract_strided_slice %187 {offsets = [0, 64], sizes = [8, 32], strides = [1, 1]} : vector<8x96xf32> to vector<8x32xf32>
    %193 = arith.mulf %191, %174 : vector<8x32xf32>
    %194 = arith.mulf %190, %189 : vector<8x32xf32>
    %195 = arith.addf %193, %194 : vector<8x32xf32>
    %196 = math.tanh %195 : vector<8x32xf32>
    %197 = arith.mulf %192, %196 : vector<8x32xf32>
    %c6_i32 = arith.constant 6 : i32
    %198 = arith.index_cast %c6_i32 : i32 to index
    %c0_83 = arith.constant 0 : index
    %c0_84 = arith.constant 0 : index
    %199 = vector.load %arg7[%198, %c0_83, %c0_84] : memref<8x8x128xf32, #tpu.memory_space<vmem>>, vector<1x8x128xf32>
    %200 = vector.shape_cast %199 : vector<1x8x128xf32> to vector<8x128xf32>
    %cst_85 = arith.constant dense<0.000000e+00> : vector<8x128xf32>
    %201 = tpu.matmul %197, %4, %cst_85 {dimension_numbers = #tpu.dot_dimension_numbers<[1], [0], [0], [1], [0, 0, 1, 1], [], []>} : vector<8x32xf32>, vector<32x128xf32>, vector<8x128xf32> -> vector<8x128xf32>
    %202 = arith.addf %200, %201 : vector<8x128xf32>
    %203 = vector.extract_strided_slice %202 {offsets = [0, 0], sizes = [8, 96], strides = [1, 1]} : vector<8x128xf32> to vector<8x96xf32>
    %204 = arith.negf %203 : vector<8x96xf32>
    %205 = math.exp %204 : vector<8x96xf32>
    %cst_86 = arith.constant 1.000000e+00 : f32
    %206 = vector.broadcast %cst_86 : f32 to vector<8x96xf32>
    %207 = arith.addf %206, %205 : vector<8x96xf32>
    %208 = arith.divf %206, %207 : vector<8x96xf32>
    %209 = vector.extract_strided_slice %202 {offsets = [0, 96], sizes = [8, 32], strides = [1, 1]} : vector<8x128xf32> to vector<8x32xf32>
    %210 = math.tanh %209 : vector<8x32xf32>
    %211 = vector.extract_strided_slice %208 {offsets = [0, 0], sizes = [8, 32], strides = [1, 1]} : vector<8x96xf32> to vector<8x32xf32>
    %212 = vector.extract_strided_slice %208 {offsets = [0, 32], sizes = [8, 32], strides = [1, 1]} : vector<8x96xf32> to vector<8x32xf32>
    %213 = vector.extract_strided_slice %208 {offsets = [0, 64], sizes = [8, 32], strides = [1, 1]} : vector<8x96xf32> to vector<8x32xf32>
    %214 = arith.mulf %212, %195 : vector<8x32xf32>
    %215 = arith.mulf %211, %210 : vector<8x32xf32>
    %216 = arith.addf %214, %215 : vector<8x32xf32>
    %217 = math.tanh %216 : vector<8x32xf32>
    %218 = arith.mulf %213, %217 : vector<8x32xf32>
    %c7_i32 = arith.constant 7 : i32
    %219 = arith.index_cast %c7_i32 : i32 to index
    %c0_87 = arith.constant 0 : index
    %c0_88 = arith.constant 0 : index
    %220 = vector.load %arg7[%219, %c0_87, %c0_88] : memref<8x8x128xf32, #tpu.memory_space<vmem>>, vector<1x8x128xf32>
    %221 = vector.shape_cast %220 : vector<1x8x128xf32> to vector<8x128xf32>
    %cst_89 = arith.constant dense<0.000000e+00> : vector<8x128xf32>
    %222 = tpu.matmul %218, %4, %cst_89 {dimension_numbers = #tpu.dot_dimension_numbers<[1], [0], [0], [1], [0, 0, 1, 1], [], []>} : vector<8x32xf32>, vector<32x128xf32>, vector<8x128xf32> -> vector<8x128xf32>
    %223 = arith.addf %221, %222 : vector<8x128xf32>
    %224 = vector.extract_strided_slice %223 {offsets = [0, 0], sizes = [8, 96], strides = [1, 1]} : vector<8x128xf32> to vector<8x96xf32>
    %225 = arith.negf %224 : vector<8x96xf32>
    %226 = math.exp %225 : vector<8x96xf32>
    %cst_90 = arith.constant 1.000000e+00 : f32
    %227 = vector.broadcast %cst_90 : f32 to vector<8x96xf32>
    %228 = arith.addf %227, %226 : vector<8x96xf32>
    %229 = arith.divf %227, %228 : vector<8x96xf32>
    %230 = vector.extract_strided_slice %223 {offsets = [0, 96], sizes = [8, 32], strides = [1, 1]} : vector<8x128xf32> to vector<8x32xf32>
    %231 = math.tanh %230 : vector<8x32xf32>
    %232 = vector.extract_strided_slice %229 {offsets = [0, 0], sizes = [8, 32], strides = [1, 1]} : vector<8x96xf32> to vector<8x32xf32>
    %233 = vector.extract_strided_slice %229 {offsets = [0, 32], sizes = [8, 32], strides = [1, 1]} : vector<8x96xf32> to vector<8x32xf32>
    %234 = vector.extract_strided_slice %229 {offsets = [0, 64], sizes = [8, 32], strides = [1, 1]} : vector<8x96xf32> to vector<8x32xf32>
    %235 = arith.mulf %233, %216 : vector<8x32xf32>
    %236 = arith.mulf %232, %231 : vector<8x32xf32>
    %237 = arith.addf %235, %236 : vector<8x32xf32>
    %238 = math.tanh %237 : vector<8x32xf32>
    %239 = arith.mulf %234, %238 : vector<8x32xf32>
    %c8_i32 = arith.constant 8 : i32
    %c0_91 = arith.constant 0 : index
    %c0_92 = arith.constant 0 : index
    %240 = vector.load %arg8[%c0_91, %c0_92] : memref<8x32xf32, #tpu.memory_space<vmem>>, vector<8x32xf32>
    tpu.vector_store %arg8[%c0_91, %c0_92], %239 {strides = array<i32>} : memref<8x32xf32, #tpu.memory_space<vmem>>, vector<8x32xf32>,
    %c0_93 = arith.constant 0 : index
    %c0_94 = arith.constant 0 : index
    %241 = vector.load %arg9[%c0_93, %c0_94] : memref<8x32xf32, #tpu.memory_space<vmem>>, vector<8x32xf32>
    tpu.vector_store %arg9[%c0_93, %c0_94], %237 {strides = array<i32>} : memref<8x32xf32, #tpu.memory_space<vmem>>, vector<8x32xf32>,
    %c0_i32_95 = arith.constant 0 : i32
    %242 = arith.cmpi eq, %arg1, %c0_i32_95 : i32
    %243 = arith.extui %242 : i1 to i32
    %c0_i32_96 = arith.constant 0 : i32
    %244 = arith.cmpi ne, %243, %c0_i32_96 : i32
    scf.if %244 {
      %c0_97 = arith.constant 0 : index
      %c0_98 = arith.constant 0 : index
      %245 = vector.load %arg6[%c0_97, %c0_98] : memref<8x32xf32, #tpu.memory_space<vmem>>, vector<8x32xf32>
      tpu.vector_store %arg6[%c0_97, %c0_98], %239 {strides = array<i32>} : memref<8x32xf32, #tpu.memory_space<vmem>>, vector<8x32xf32>,
    } else {
    }
    return
  }
  func.func @transform_0(%arg0: i32, %arg1: i32) -> (i32, i32, i32) {
    %c0_i32 = arith.constant 0 : i32
    %c0_i32_0 = arith.constant 0 : i32
    return %arg1, %arg0, %c0_i32 : i32, i32, i32
  }
  func.func @transform_1(%arg0: i32, %arg1: i32) -> (i32, i32) {
    %c0_i32 = arith.constant 0 : i32
    %c0_i32_0 = arith.constant 0 : i32
    %c0_i32_1 = arith.constant 0 : i32
    return %c0_i32, %c0_i32_0 : i32, i32
  }
  func.func @transform_2(%arg0: i32, %arg1: i32) -> (i32, i32) {
    %c0_i32 = arith.constant 0 : i32
    %c0_i32_0 = arith.constant 0 : i32
    %c0_i32_1 = arith.constant 0 : i32
    return %c0_i32, %c0_i32_0 : i32, i32
  }
  func.func @transform_3(%arg0: i32, %arg1: i32) -> (i32, i32) {
    %c0_i32 = arith.constant 0 : i32
    %c0_i32_0 = arith.constant 0 : i32
    %c0_i32_1 = arith.constant 0 : i32
    return %c0_i32, %c0_i32_0 : i32, i32
  }
  func.func @transform_4(%arg0: i32, %arg1: i32) -> (i32, i32) {
    %c0_i32 = arith.constant 0 : i32
    %c0_i32_0 = arith.constant 0 : i32
    return %arg0, %c0_i32 : i32, i32
  }
}

</mosaic_0001>

<llo_original>
// kernel: lstm_embedding_forward.1
$region0: #{lstm_embedding_forward.1}
  #allocation0 [shape = 'u32[]', space=smem, size = 0x4, offset = 0x4, fixed_abs, tag = 'smem constant byte address 0x4 - core index']
  #allocation1 [shape = 'u32[72,128]{1,0:T(1,128)}', space=vmem, size = 0x9000, scoped, tag = 'internal scratch']
  #allocation2 [shape = 'f32[8,8,128]{2,1,0:T(8,128)}', space=vmem, size = 0x8000, scoped, tag = 'scratch operand']
  #allocation3 [shape = 'f32[8,32]{1,0:T(8,128)}', space=vmem, size = 0x1000, scoped, tag = 'scratch operand']
  #allocation4 [shape = 'f32[8,32]{1,0:T(8,128)}', space=vmem, size = 0x1000, scoped, tag = 'scratch operand']
  %s0 = inlined_call_operand.vmem [shape: f32[8,8,64], index: 0, kind: input, shape index: {}]
  %s1 = inlined_call_operand.vmem [shape: f32[64,128], index: 1, kind: input, shape index: {}]
  %s2 = inlined_call_operand.vmem [shape: f32[32,128], index: 2, kind: input, shape index: {}]
  %s3 = inlined_call_operand.vmem [shape: f32[1,128], index: 3, kind: input, shape index: {}]
  %s4 = inlined_call_operand.vmem [shape: f32[8,32], index: 4, kind: output, shape index: {}]
  %s5 = sld [smem:[#allocation0]]
  $region34: #{lstm_embedding_forward.1} parent=0
    _
  %s7 = ssub.s32 1, %s5
  %s8 = scalar_select 0, %s7, %s5
  // Predicated region
  $region2: #{lstm_embedding_forward.1} parent=0 // pred_check
    _
  $region3: #{lstm_embedding_forward.1} parent=0 // pred_check_branch
    %10 = sbr.rel (0) target = $region5
  $region4: #{lstm_embedding_forward.1} parent=0 // pred_region
    _
  $region5: #{lstm_embedding_forward.1} parent=0 // pred_fallthru
    _
  // Predicated region
  $region6: #{lstm_embedding_forward.1} parent=0 // pred_check
    _
  $region7: #{lstm_embedding_forward.1} parent=0 // pred_check_branch
    %12 = sbr.rel (0) target = $region9
  $region8: #{lstm_embedding_forward.1} parent=0 // pred_region
    _
  $region9: #{lstm_embedding_forward.1} parent=0 // pred_fallthru
    _
  // Predicated region
  $region10: #{lstm_embedding_forward.1} parent=0 // pred_check
    _
  $region11: #{lstm_embedding_forward.1} parent=0 // pred_check_branch
    %14 = sbr.rel (0) target = $region13
  $region12: #{lstm_embedding_forward.1} parent=0 // pred_region
    _
  $region13: #{lstm_embedding_forward.1} parent=0 // pred_fallthru
    _
  // Predicated region
  $region14: #{lstm_embedding_forward.1} parent=0 // pred_check
    _
  $region15: #{lstm_embedding_forward.1} parent=0 // pred_check_branch
    %16 = sbr.rel (0) target = $region17
  $region16: #{lstm_embedding_forward.1} parent=0 // pred_region
    _
  $region17: #{lstm_embedding_forward.1} parent=0 // pred_fallthru
    _
  %p17 = scmp.eq.s32.totalorder 0, 0
  // Predicated region
  $region18: #{lstm_embedding_forward.1} parent=0 // pred_check
    %p18 = pneg %p17
  $region19: #{lstm_embedding_forward.1} parent=0 // pred_check_branch
    %20 = sbr.rel (%p18) target = $region21
  $region20: #{lstm_embedding_forward.1} parent=0 // pred_region
    %vm21 = vcmask 261120
    %22 = vst.msk [vmem:[#allocation3] sm:$0xff] %vm21, 0.0
    %23 = vst.msk [vmem:[#allocation4] sm:$0xff] %vm21, 0.0
  $region21: #{lstm_embedding_forward.1} parent=0 // pred_fallthru
    _
  %v24 = vld [vmem:[%s1] sm:$0xff]
  %v25 = vld [vmem:[%s1 + $0x8] sm:$0xff]
  %v26 = vld [vmem:[%s1 + $0x10] sm:$0xff]
  %v27 = vld [vmem:[%s1 + $0x18] sm:$0xff]
  %v28 = vld [vmem:[%s1 + $0x20] sm:$0xff]
  %v29 = vld [vmem:[%s1 + $0x28] sm:$0xff]
  %v30 = vld [vmem:[%s1 + $0x30] sm:$0xff]
  %v31 = vld [vmem:[%s1 + $0x38] sm:$0xff]
  %v32 = vld [vmem:[%s2] sm:$0xff]
  %v33 = vld [vmem:[%s2 + $0x8] sm:$0xff]
  %v34 = vld [vmem:[%s2 + $0x10] sm:$0xff]
  %v35 = vld [vmem:[%s2 + $0x18] sm:$0xff]
  %v36 = vld [vmem:[%s3] sm:$0x1]
  %v37 = vld [vmem:[%s0] sm:$0xff]
  %v39 = vperm.slane %v36, 0
  %vm41 = vcmask 523264
  %v43 = vsel %vm41, %v37, 0
  %45 = vmatpush.msra.mxu0 0.0
  %46 = vmatpush.msra.mxu0 0.0
  %47 = vmatpush.msra.mxu0 0.0
  %48 = vmatpush.msra.mxu0 0.0
  %49 = vmatpush.msra.mxu0 0.0
  %50 = vmatpush.msra.mxu0 0.0
  %51 = vmatpush.msra.mxu0 0.0
  %52 = vmatpush.msra.mxu0 0.0
  %53 = vmatpush.msra.mxu0 %v31
  %54 = vmatpush.msra.mxu0 %v30
  %55 = vmatpush.msra.mxu0 %v29
  %56 = vmatpush.msra.mxu0 %v28
  %57 = vmatpush.msra.mxu0 %v27
  %58 = vmatpush.msra.mxu0 %v26
  %59 = vmatpush.msra.mxu0 %v25
  %60 = vmatpush.msra.mxu0 %v24
  %61 = vmatmul.f32.gmra.mxu0 %v43
  %v62 = vpop.f32.mrf.mxu0
  %v63 = vadd.f32 %v39, %v62
  %64 = vdwg.mxu0
  %65 = vst [vmem:[#allocation2] sm:$0xff] %v63
  %s66 = scalar_lea.vmem %s0, 8
  %v67 = vld [vmem:[%s66] sm:$0xff]
  %v69 = vsel %vm41, %v67, 0
  %71 = vmatpush.msra.mxu0 0.0
  %72 = vmatpush.msra.mxu0 0.0
  %73 = vmatpush.msra.mxu0 0.0
  %74 = vmatpush.msra.mxu0 0.0
  %75 = vmatpush.msra.mxu0 0.0
  %76 = vmatpush.msra.mxu0 0.0
  %77 = vmatpush.msra.mxu0 0.0
  %78 = vmatpush.msra.mxu0 0.0
  %79 = vmatpush.msra.mxu0 %v31
  %80 = vmatpush.msra.mxu0 %v30
  %81 = vmatpush.msra.mxu0 %v29
  %82 = vmatpush.msra.mxu0 %v28
  %83 = vmatpush.msra.mxu0 %v27
  %84 = vmatpush.msra.mxu0 %v26
  %85 = vmatpush.msra.mxu0 %v25
  %86 = vmatpush.msra.mxu0 %v24
  %87 = vmatmul.f32.gmra.mxu0 %v69
  %v88 = vpop.f32.mrf.mxu0
  %v89 = vadd.f32 %v39, %v88
  %90 = vdwg.mxu0
  %s91 = scalar_lea.vmem [#allocation2], 8
  %92 = vst [vmem:[%s91] sm:$0xff] %v89
  %s93 = scalar_lea.vmem %s0, 16
  %v94 = vld [vmem:[%s93] sm:$0xff]
  %v96 = vsel %vm41, %v94, 0
  %98 = vmatpush.msra.mxu0 0.0
  %99 = vmatpush.msra.mxu0 0.0
  %100 = vmatpush.msra.mxu0 0.0
  %101 = vmatpush.msra.mxu0 0.0
  %102 = vmatpush.msra.mxu0 0.0
  %103 = vmatpush.msra.mxu0 0.0
  %104 = vmatpush.msra.mxu0 0.0
  %105 = vmatpush.msra.mxu0 0.0
  %106 = vmatpush.msra.mxu0 %v31
  %107 = vmatpush.msra.mxu0 %v30
  %108 = vmatpush.msra.mxu0 %v29
  %109 = vmatpush.msra.mxu0 %v28
  %110 = vmatpush.msra.mxu0 %v27
  %111 = vmatpush.msra.mxu0 %v26
  %112 = vmatpush.msra.mxu0 %v25
  %113 = vmatpush.msra.mxu0 %v24
  %114 = vmatmul.f32.gmra.mxu0 %v96
  %v115 = vpop.f32.mrf.mxu0
  %v116 = vadd.f32 %v39, %v115
  %117 = vdwg.mxu0
  %s118 = scalar_lea.vmem [#allocation2], 16
  %119 = vst [vmem:[%s118] sm:$0xff] %v116
  %s120 = scalar_lea.vmem %s0, 24
  %v121 = vld [vmem:[%s120] sm:$0xff]
  %v123 = vsel %vm41, %v121, 0
  %125 = vmatpush.msra.mxu0 0.0
  %126 = vmatpush.msra.mxu0 0.0
  %127 = vmatpush.msra.mxu0 0.0
  %128 = vmatpush.msra.mxu0 0.0
  %129 = vmatpush.msra.mxu0 0.0
  %130 = vmatpush.msra.mxu0 0.0
  %131 = vmatpush.msra.mxu0 0.0
  %132 = vmatpush.msra.mxu0 0.0
  %133 = vmatpush.msra.mxu0 %v31
  %134 = vmatpush.msra.mxu0 %v30
  %135 = vmatpush.msra.mxu0 %v29
  %136 = vmatpush.msra.mxu0 %v28
  %137 = vmatpush.msra.mxu0 %v27
  %138 = vmatpush.msra.mxu0 %v26
  %139 = vmatpush.msra.mxu0 %v25
  %140 = vmatpush.msra.mxu0 %v24
  %141 = vmatmul.f32.gmra.mxu0 %v123
  %v142 = vpop.f32.mrf.mxu0
  %v143 = vadd.f32 %v39, %v142
  %144 = vdwg.mxu0
  %s145 = scalar_lea.vmem [#allocation2], 24
  %146 = vst [vmem:[%s145] sm:$0xff] %v143
  %s147 = scalar_lea.vmem %s0, 32
  %v148 = vld [vmem:[%s147] sm:$0xff]
  %v150 = vsel %vm41, %v148, 0
  %152 = vmatpush.msra.mxu0 0.0
  %153 = vmatpush.msra.mxu0 0.0
  %154 = vmatpush.msra.mxu0 0.0
  %155 = vmatpush.msra.mxu0 0.0
  %156 = vmatpush.msra.mxu0 0.0
  %157 = vmatpush.msra.mxu0 0.0
  %158 = vmatpush.msra.mxu0 0.0
  %159 = vmatpush.msra.mxu0 0.0
  %160 = vmatpush.msra.mxu0 %v31
  %161 = vmatpush.msra.mxu0 %v30
  %162 = vmatpush.msra.mxu0 %v29
  %163 = vmatpush.msra.mxu0 %v28
  %164 = vmatpush.msra.mxu0 %v27
  %165 = vmatpush.msra.mxu0 %v26
  %166 = vmatpush.msra.mxu0 %v25
  %167 = vmatpush.msra.mxu0 %v24
  %168 = vmatmul.f32.gmra.mxu0 %v150
  %v169 = vpop.f32.mrf.mxu0
  %v170 = vadd.f32 %v39, %v169
  %171 = vdwg.mxu0
  %s172 = scalar_lea.vmem [#allocation2], 32
  %173 = vst [vmem:[%s172] sm:$0xff] %v170
  %s174 = scalar_lea.vmem %s0, 40
  %v175 = vld [vmem:[%s174] sm:$0xff]
  %v177 = vsel %vm41, %v175, 0
  %179 = vmatpush.msra.mxu0 0.0
  %180 = vmatpush.msra.mxu0 0.0
  %181 = vmatpush.msra.mxu0 0.0
  %182 = vmatpush.msra.mxu0 0.0
  %183 = vmatpush.msra.mxu0 0.0
  %184 = vmatpush.msra.mxu0 0.0
  %185 = vmatpush.msra.mxu0 0.0
  %186 = vmatpush.msra.mxu0 0.0
  %187 = vmatpush.msra.mxu0 %v31
  %188 = vmatpush.msra.mxu0 %v30
  %189 = vmatpush.msra.mxu0 %v29
  %190 = vmatpush.msra.mxu0 %v28
  %191 = vmatpush.msra.mxu0 %v27
  %192 = vmatpush.msra.mxu0 %v26
  %193 = vmatpush.msra.mxu0 %v25
  %194 = vmatpush.msra.mxu0 %v24
  %195 = vmatmul.f32.gmra.mxu0 %v177
  %v196 = vpop.f32.mrf.mxu0
  %v197 = vadd.f32 %v39, %v196
  %198 = vdwg.mxu0
  %s199 = scalar_lea.vmem [#allocation2], 40
  %200 = vst [vmem:[%s199] sm:$0xff] %v197
  %s201 = scalar_lea.vmem %s0, 48
  %v202 = vld [vmem:[%s201] sm:$0xff]
  %v204 = vsel %vm41, %v202, 0
  %206 = vmatpush.msra.mxu0 0.0
  %207 = vmatpush.msra.mxu0 0.0
  %208 = vmatpush.msra.mxu0 0.0
  %209 = vmatpush.msra.mxu0 0.0
  %210 = vmatpush.msra.mxu0 0.0
  %211 = vmatpush.msra.mxu0 0.0
  %212 = vmatpush.msra.mxu0 0.0
  %213 = vmatpush.msra.mxu0 0.0
  %214 = vmatpush.msra.mxu0 %v31
  %215 = vmatpush.msra.mxu0 %v30
  %216 = vmatpush.msra.mxu0 %v29
  %217 = vmatpush.msra.mxu0 %v28
  %218 = vmatpush.msra.mxu0 %v27
  %219 = vmatpush.msra.mxu0 %v26
  %220 = vmatpush.msra.mxu0 %v25
  %221 = vmatpush.msra.mxu0 %v24
  %222 = vmatmul.f32.gmra.mxu0 %v204
  %v223 = vpop.f32.mrf.mxu0
  %v224 = vadd.f32 %v39, %v223
  %225 = vdwg.mxu0
  %s226 = scalar_lea.vmem [#allocation2], 48
  %227 = vst [vmem:[%s226] sm:$0xff] %v224
  %s228 = scalar_lea.vmem %s0, 56
  %v229 = vld [vmem:[%s228] sm:$0xff]
  %v231 = vsel %vm41, %v229, 0
  %233 = vmatpush.msra.mxu0 0.0
  %234 = vmatpush.msra.mxu0 0.0
  %235 = vmatpush.msra.mxu0 0.0
  %236 = vmatpush.msra.mxu0 0.0
  %237 = vmatpush.msra.mxu0 0.0
  %238 = vmatpush.msra.mxu0 0.0
  %239 = vmatpush.msra.mxu0 0.0
  %240 = vmatpush.msra.mxu0 0.0
  %241 = vmatpush.msra.mxu0 %v31
  %242 = vmatpush.msra.mxu0 %v30
  %243 = vmatpush.msra.mxu0 %v29
  %244 = vmatpush.msra.mxu0 %v28
  %245 = vmatpush.msra.mxu0 %v27
  %246 = vmatpush.msra.mxu0 %v26
  %247 = vmatpush.msra.mxu0 %v25
  %248 = vmatpush.msra.mxu0 %v24
  %249 = vmatmul.f32.gmra.mxu0 %v231
  %v250 = vpop.f32.mrf.mxu0
  %v251 = vadd.f32 %v39, %v250
  %252 = vdwg.mxu0
  %s253 = scalar_lea.vmem [#allocation2], 56
  %254 = vst [vmem:[%s253] sm:$0xff] %v251
  %v255 = vld [vmem:[#allocation3] sm:$0xff]
  %v256 = vld [vmem:[#allocation4] sm:$0xff]
  %v257 = vld [vmem:[#allocation2] sm:$0xff]
  %vm258 = vcmask 261120
  %v260 = vsel %vm258, %v255, 0
  %262 = vmatpush.msra.mxu0 0.0
  %263 = vmatpush.msra.mxu0 0.0
  %264 = vmatpush.msra.mxu0 0.0
  %265 = vmatpush.msra.mxu0 0.0
  %266 = vmatpush.msra.mxu0 0.0
  %267 = vmatpush.msra.mxu0 0.0
  %268 = vmatpush.msra.mxu0 0.0
  %269 = vmatpush.msra.mxu0 0.0
  %270 = vmatpush.msra.mxu0 0.0
  %271 = vmatpush.msra.mxu0 0.0
  %272 = vmatpush.msra.mxu0 0.0
  %273 = vmatpush.msra.mxu0 0.0
  %274 = vmatpush.msra.mxu0 %v35
  %275 = vmatpush.msra.mxu0 %v34
  %276 = vmatpush.msra.mxu0 %v33
  %277 = vmatpush.msra.mxu0 %v32
  %278 = vmatmul.f32.gmra.mxu0 %v260
  %v279 = vpop.f32.mrf.mxu0
  %v280 = vadd.f32 0.0, %v279
  %281 = vdwg.mxu0
  %v282 = vadd.f32 %v257, %v280
  %v283 = vxor.u32 %v282, 2147483648
  %v284 = vmul.f32 %v283, 1.442695
  %v285 = vpow.pop %v284
  %v286 = vadd.f32 %v285, 1.0
  %v287 = vrcp.pop %v286
  %v288 = vmul.f32 %v286, %v287
  %v289 = vsub.f32 1.0, %v288
  %v290 = vmul.f32 %v287, %v289
  %v291 = vadd.f32 %v287, %v290
  %vm292 = vweird.f32 %v286
  %vm293 = vweird.f32 %v287
  %vm294 = vmor %vm292, %vm293
  %v295 = vsel %vm294, %v287, %v291
  %v296 = vand.u32 2147483647, %v286
  %vm297 = vcmp.eq.f32.partialorder %v296, 8.507059e+37
  %v298 = vand.u32 %v286, 2147483648
  %v299 = vor.u32 1.1754944e-38, %v298
  %v300 = vsel %vm297, %v299, %v295
  %v301 = vmul.f32 1.0, %v300
  %v302 = vtanh.pop %v282
  %304 = vrot.lane.b32.xlu0 %v256, 32
  %v305 = vpop.permute.xlu0 %304
  %v307 = vmul.f32 %v301, %v305
  %309 = vrot.lane.b32.xlu0 %v302, 32
  %v310 = vpop.permute.xlu0 %309
  %v312 = vmul.f32 %v301, %v310
  %314 = vrot.lane.b32.xlu0 %v312, 32
  %v315 = vpop.permute.xlu0 %314
  %v317 = vadd.f32 %v307, %v315
  %v318 = vtanh.pop %v317
  %320 = vrot.lane.b32.xlu0 %v318, 32
  %v321 = vpop.permute.xlu0 %320
  %v323 = vmul.f32 %v301, %v321
  %v324 = vld [vmem:[%s91] sm:$0xff]
  %326 = vrot.lane.b32.xlu0 %v323, 64
  %v327 = vpop.permute.xlu0 %326
  %v328 = vsel %vm258, %v327, 0
  %330 = vmatpush.msra.mxu0 0.0
  %331 = vmatpush.msra.mxu0 0.0
  %332 = vmatpush.msra.mxu0 0.0
  %333 = vmatpush.msra.mxu0 0.0
  %334 = vmatpush.msra.mxu0 0.0
  %335 = vmatpush.msra.mxu0 0.0
  %336 = vmatpush.msra.mxu0 0.0
  %337 = vmatpush.msra.mxu0 0.0
  %338 = vmatpush.msra.mxu0 0.0
  %339 = vmatpush.msra.mxu0 0.0
  %340 = vmatpush.msra.mxu0 0.0
  %341 = vmatpush.msra.mxu0 0.0
  %342 = vmatpush.msra.mxu0 %v35
  %343 = vmatpush.msra.mxu0 %v34
  %344 = vmatpush.msra.mxu0 %v33
  %345 = vmatpush.msra.mxu0 %v32
  %346 = vmatmul.f32.gmra.mxu0 %v328
  %v347 = vpop.f32.mrf.mxu0
  %v348 = vadd.f32 0.0, %v347
  %349 = vdwg.mxu0
  %v350 = vadd.f32 %v324, %v348
  %v351 = vxor.u32 %v350, 2147483648
  %v352 = vmul.f32 %v351, 1.442695
  %v353 = vpow.pop %v352
  %v354 = vadd.f32 %v353, 1.0
  %v355 = vrcp.pop %v354
  %v356 = vmul.f32 %v354, %v355
  %v357 = vsub.f32 1.0, %v356
  %v358 = vmul.f32 %v355, %v357
  %v359 = vadd.f32 %v355, %v358
  %vm360 = vweird.f32 %v354
  %vm361 = vweird.f32 %v355
  %vm362 = vmor %vm360, %vm361
  %v363 = vsel %vm362, %v355, %v359
  %v364 = vand.u32 2147483647, %v354
  %vm365 = vcmp.eq.f32.partialorder %v364, 8.507059e+37
  %v366 = vand.u32 %v354, 2147483648
  %v367 = vor.u32 1.1754944e-38, %v366
  %v368 = vsel %vm365, %v367, %v363
  %v369 = vmul.f32 1.0, %v368
  %v370 = vtanh.pop %v350
  %v371 = vmul.f32 %v369, %v317
  %373 = vrot.lane.b32.xlu0 %v370, 32
  %v374 = vpop.permute.xlu0 %373
  %v376 = vmul.f32 %v369, %v374
  %378 = vrot.lane.b32.xlu0 %v376, 32
  %v379 = vpop.permute.xlu0 %378
  %v381 = vadd.f32 %v371, %v379
  %v382 = vtanh.pop %v381
  %384 = vrot.lane.b32.xlu0 %v382, 32
  %v385 = vpop.permute.xlu0 %384
  %v387 = vmul.f32 %v369, %v385
  %v388 = vld [vmem:[%s118] sm:$0xff]
  %390 = vrot.lane.b32.xlu0 %v387, 64
  %v391 = vpop.permute.xlu0 %390
  %v392 = vsel %vm258, %v391, 0
  %394 = vmatpush.msra.mxu0 0.0
  %395 = vmatpush.msra.mxu0 0.0
  %396 = vmatpush.msra.mxu0 0.0
  %397 = vmatpush.msra.mxu0 0.0
  %398 = vmatpush.msra.mxu0 0.0
  %399 = vmatpush.msra.mxu0 0.0
  %400 = vmatpush.msra.mxu0 0.0
  %401 = vmatpush.msra.mxu0 0.0
  %402 = vmatpush.msra.mxu0 0.0
  %403 = vmatpush.msra.mxu0 0.0
  %404 = vmatpush.msra.mxu0 0.0
  %405 = vmatpush.msra.mxu0 0.0
  %406 = vmatpush.msra.mxu0 %v35
  %407 = vmatpush.msra.mxu0 %v34
  %408 = vmatpush.msra.mxu0 %v33
  %409 = vmatpush.msra.mxu0 %v32
  %410 = vmatmul.f32.gmra.mxu0 %v392
  %v411 = vpop.f32.mrf.mxu0
  %v412 = vadd.f32 0.0, %v411
  %413 = vdwg.mxu0
  %v414 = vadd.f32 %v388, %v412
  %v415 = vxor.u32 %v414, 2147483648
  %v416 = vmul.f32 %v415, 1.442695
  %v417 = vpow.pop %v416
  %v418 = vadd.f32 %v417, 1.0
  %v419 = vrcp.pop %v418
  %v420 = vmul.f32 %v418, %v419
  %v421 = vsub.f32 1.0, %v420
  %v422 = vmul.f32 %v419, %v421
  %v423 = vadd.f32 %v419, %v422
  %vm424 = vweird.f32 %v418
  %vm425 = vweird.f32 %v419
  %vm426 = vmor %vm424, %vm425
  %v427 = vsel %vm426, %v419, %v423
  %v428 = vand.u32 2147483647, %v418
  %vm429 = vcmp.eq.f32.partialorder %v428, 8.507059e+37
  %v430 = vand.u32 %v418, 2147483648
  %v431 = vor.u32 1.1754944e-38, %v430
  %v432 = vsel %vm429, %v431, %v427
  %v433 = vmul.f32 1.0, %v432
  %v434 = vtanh.pop %v414
  %v435 = vmul.f32 %v433, %v381
  %437 = vrot.lane.b32.xlu0 %v434, 32
  %v438 = vpop.permute.xlu0 %437
  %v440 = vmul.f32 %v433, %v438
  %442 = vrot.lane.b32.xlu0 %v440, 32
  %v443 = vpop.permute.xlu0 %442
  %v445 = vadd.f32 %v435, %v443
  %v446 = vtanh.pop %v445
  %448 = vrot.lane.b32.xlu0 %v446, 32
  %v449 = vpop.permute.xlu0 %448
  %v451 = vmul.f32 %v433, %v449
  %v452 = vld [vmem:[%s145] sm:$0xff]
  %454 = vrot.lane.b32.xlu0 %v451, 64
  %v455 = vpop.permute.xlu0 %454
  %v456 = vsel %vm258, %v455, 0
  %458 = vmatpush.msra.mxu0 0.0
  %459 = vmatpush.msra.mxu0 0.0
  %460 = vmatpush.msra.mxu0 0.0
  %461 = vmatpush.msra.mxu0 0.0
  %462 = vmatpush.msra.mxu0 0.0
  %463 = vmatpush.msra.mxu0 0.0
  %464 = vmatpush.msra.mxu0 0.0
  %465 = vmatpush.msra.mxu0 0.0
  %466 = vmatpush.msra.mxu0 0.0
  %467 = vmatpush.msra.mxu0 0.0
  %468 = vmatpush.msra.mxu0 0.0
  %469 = vmatpush.msra.mxu0 0.0
  %470 = vmatpush.msra.mxu0 %v35
  %471 = vmatpush.msra.mxu0 %v34
  %472 = vmatpush.msra.mxu0 %v33
  %473 = vmatpush.msra.mxu0 %v32
  %474 = vmatmul.f32.gmra.mxu0 %v456
  %v475 = vpop.f32.mrf.mxu0
  %v476 = vadd.f32 0.0, %v475
  %477 = vdwg.mxu0
  %v478 = vadd.f32 %v452, %v476
  %v479 = vxor.u32 %v478, 2147483648
  %v480 = vmul.f32 %v479, 1.442695
  %v481 = vpow.pop %v480
  %v482 = vadd.f32 %v481, 1.0
  %v483 = vrcp.pop %v482
  %v484 = vmul.f32 %v482, %v483
  %v485 = vsub.f32 1.0, %v484
  %v486 = vmul.f32 %v483, %v485
  %v487 = vadd.f32 %v483, %v486
  %vm488 = vweird.f32 %v482
  %vm489 = vweird.f32 %v483
  %vm490 = vmor %vm488, %vm489
  %v491 = vsel %vm490, %v483, %v487
  %v492 = vand.u32 2147483647, %v482
  %vm493 = vcmp.eq.f32.partialorder %v492, 8.507059e+37
  %v494 = vand.u32 %v482, 2147483648
  %v495 = vor.u32 1.1754944e-38, %v494
  %v496 = vsel %vm493, %v495, %v491
  %v497 = vmul.f32 1.0, %v496
  %v498 = vtanh.pop %v478
  %v499 = vmul.f32 %v497, %v445
  %501 = vrot.lane.b32.xlu0 %v498, 32
  %v502 = vpop.permute.xlu0 %501
  %v504 = vmul.f32 %v497, %v502
  %506 = vrot.lane.b32.xlu0 %v504, 32
  %v507 = vpop.permute.xlu0 %506
  %v509 = vadd.f32 %v499, %v507
  %v510 = vtanh.pop %v509
  %512 = vrot.lane.b32.xlu0 %v510, 32
  %v513 = vpop.permute.xlu0 %512
  %v515 = vmul.f32 %v497, %v513
  %v516 = vld [vmem:[%s172] sm:$0xff]
  %518 = vrot.lane.b32.xlu0 %v515, 64
  %v519 = vpop.permute.xlu0 %518
  %v520 = vsel %vm258, %v519, 0
  %522 = vmatpush.msra.mxu0 0.0
  %523 = vmatpush.msra.mxu0 0.0
  %524 = vmatpush.msra.mxu0 0.0
  %525 = vmatpush.msra.mxu0 0.0
  %526 = vmatpush.msra.mxu0 0.0
  %527 = vmatpush.msra.mxu0 0.0
  %528 = vmatpush.msra.mxu0 0.0
  %529 = vmatpush.msra.mxu0 0.0
  %530 = vmatpush.msra.mxu0 0.0
  %531 = vmatpush.msra.mxu0 0.0
  %532 = vmatpush.msra.mxu0 0.0
  %533 = vmatpush.msra.mxu0 0.0
  %534 = vmatpush.msra.mxu0 %v35
  %535 = vmatpush.msra.mxu0 %v34
  %536 = vmatpush.msra.mxu0 %v33
  %537 = vmatpush.msra.mxu0 %v32
  %538 = vmatmul.f32.gmra.mxu0 %v520
  %v539 = vpop.f32.mrf.mxu0
  %v540 = vadd.f32 0.0, %v539
  %541 = vdwg.mxu0
  %v542 = vadd.f32 %v516, %v540
  %v543 = vxor.u32 %v542, 2147483648
  %v544 = vmul.f32 %v543, 1.442695
  %v545 = vpow.pop %v544
  %v546 = vadd.f32 %v545, 1.0
  %v547 = vrcp.pop %v546
  %v548 = vmul.f32 %v546, %v547
  %v549 = vsub.f32 1.0, %v548
  %v550 = vmul.f32 %v547, %v549
  %v551 = vadd.f32 %v547, %v550
  %vm552 = vweird.f32 %v546
  %vm553 = vweird.f32 %v547
  %vm554 = vmor %vm552, %vm553
  %v555 = vsel %vm554, %v547, %v551
  %v556 = vand.u32 2147483647, %v546
  %vm557 = vcmp.eq.f32.partialorder %v556, 8.507059e+37
  %v558 = vand.u32 %v546, 2147483648
  %v559 = vor.u32 1.1754944e-38, %v558
  %v560 = vsel %vm557, %v559, %v555
  %v561 = vmul.f32 1.0, %v560
  %v562 = vtanh.pop %v542
  %v563 = vmul.f32 %v561, %v509
  %565 = vrot.lane.b32.xlu0 %v562, 32
  %v566 = vpop.permute.xlu0 %565
  %v568 = vmul.f32 %v561, %v566
  %570 = vrot.lane.b32.xlu0 %v568, 32
  %v571 = vpop.permute.xlu0 %570
  %v573 = vadd.f32 %v563, %v571
  %v574 = vtanh.pop %v573
  %576 = vrot.lane.b32.xlu0 %v574, 32
  %v577 = vpop.permute.xlu0 %576
  %v579 = vmul.f32 %v561, %v577
  %v580 = vld [vmem:[%s199] sm:$0xff]
  %582 = vrot.lane.b32.xlu0 %v579, 64
  %v583 = vpop.permute.xlu0 %582
  %v584 = vsel %vm258, %v583, 0
  %586 = vmatpush.msra.mxu0 0.0
  %587 = vmatpush.msra.mxu0 0.0
  %588 = vmatpush.msra.mxu0 0.0
  %589 = vmatpush.msra.mxu0 0.0
  %590 = vmatpush.msra.mxu0 0.0
  %591 = vmatpush.msra.mxu0 0.0
  %592 = vmatpush.msra.mxu0 0.0
  %593 = vmatpush.msra.mxu0 0.0
  %594 = vmatpush.msra.mxu0 0.0
  %595 = vmatpush.msra.mxu0 0.0
  %596 = vmatpush.msra.mxu0 0.0
  %597 = vmatpush.msra.mxu0 0.0
  %598 = vmatpush.msra.mxu0 %v35
  %599 = vmatpush.msra.mxu0 %v34
  %600 = vmatpush.msra.mxu0 %v33
  %601 = vmatpush.msra.mxu0 %v32
  %602 = vmatmul.f32.gmra.mxu0 %v584
  %v603 = vpop.f32.mrf.mxu0
  %v604 = vadd.f32 0.0, %v603
  %605 = vdwg.mxu0
  %v606 = vadd.f32 %v580, %v604
  %v607 = vxor.u32 %v606, 2147483648
  %v608 = vmul.f32 %v607, 1.442695
  %v609 = vpow.pop %v608
  %v610 = vadd.f32 %v609, 1.0
  %v611 = vrcp.pop %v610
  %v612 = vmul.f32 %v610, %v611
  %v613 = vsub.f32 1.0, %v612
  %v614 = vmul.f32 %v611, %v613
  %v615 = vadd.f32 %v611, %v614
  %vm616 = vweird.f32 %v610
  %vm617 = vweird.f32 %v611
  %vm618 = vmor %vm616, %vm617
  %v619 = vsel %vm618, %v611, %v615
  %v620 = vand.u32 2147483647, %v610
  %vm621 = vcmp.eq.f32.partialorder %v620, 8.507059e+37
  %v622 = vand.u32 %v610, 2147483648
  %v623 = vor.u32 1.1754944e-38, %v622
  %v624 = vsel %vm621, %v623, %v619
  %v625 = vmul.f32 1.0, %v624
  %v626 = vtanh.pop %v606
  %v627 = vmul.f32 %v625, %v573
  %629 = vrot.lane.b32.xlu0 %v626, 32
  %v630 = vpop.permute.xlu0 %629
  %v632 = vmul.f32 %v625, %v630
  %634 = vrot.lane.b32.xlu0 %v632, 32
  %v635 = vpop.permute.xlu0 %634
  %v637 = vadd.f32 %v627, %v635
  %v638 = vtanh.pop %v637
  %640 = vrot.lane.b32.xlu0 %v638, 32
  %v641 = vpop.permute.xlu0 %640
  %v643 = vmul.f32 %v625, %v641
  %v644 = vld [vmem:[%s226] sm:$0xff]
  %646 = vrot.lane.b32.xlu0 %v643, 64
  %v647 = vpop.permute.xlu0 %646
  %v648 = vsel %vm258, %v647, 0
  %650 = vmatpush.msra.mxu0 0.0
  %651 = vmatpush.msra.mxu0 0.0
  %652 = vmatpush.msra.mxu0 0.0
  %653 = vmatpush.msra.mxu0 0.0
  %654 = vmatpush.msra.mxu0 0.0
  %655 = vmatpush.msra.mxu0 0.0
  %656 = vmatpush.msra.mxu0 0.0
  %657 = vmatpush.msra.mxu0 0.0
  %658 = vmatpush.msra.mxu0 0.0
  %659 = vmatpush.msra.mxu0 0.0
  %660 = vmatpush.msra.mxu0 0.0
  %661 = vmatpush.msra.mxu0 0.0
  %662 = vmatpush.msra.mxu0 %v35
  %663 = vmatpush.msra.mxu0 %v34
  %664 = vmatpush.msra.mxu0 %v33
  %665 = vmatpush.msra.mxu0 %v32
  %666 = vmatmul.f32.gmra.mxu0 %v648
  %v667 = vpop.f32.mrf.mxu0
  %v668 = vadd.f32 0.0, %v667
  %669 = vdwg.mxu0
  %v670 = vadd.f32 %v644, %v668
  %v671 = vxor.u32 %v670, 2147483648
  %v672 = vmul.f32 %v671, 1.442695
  %v673 = vpow.pop %v672
  %v674 = vadd.f32 %v673, 1.0
  %v675 = vrcp.pop %v674
  %v676 = vmul.f32 %v674, %v675
  %v677 = vsub.f32 1.0, %v676
  %v678 = vmul.f32 %v675, %v677
  %v679 = vadd.f32 %v675, %v678
  %vm680 = vweird.f32 %v674
  %vm681 = vweird.f32 %v675
  %vm682 = vmor %vm680, %vm681
  %v683 = vsel %vm682, %v675, %v679
  %v684 = vand.u32 2147483647, %v674
  %vm685 = vcmp.eq.f32.partialorder %v684, 8.507059e+37
  %v686 = vand.u32 %v674, 2147483648
  %v687 = vor.u32 1.1754944e-38, %v686
  %v688 = vsel %vm685, %v687, %v683
  %v689 = vmul.f32 1.0, %v688
  %v690 = vtanh.pop %v670
  %v691 = vmul.f32 %v689, %v637
  %693 = vrot.lane.b32.xlu0 %v690, 32
  %v694 = vpop.permute.xlu0 %693
  %v696 = vmul.f32 %v689, %v694
  %698 = vrot.lane.b32.xlu0 %v696, 32
  %v699 = vpop.permute.xlu0 %698
  %v701 = vadd.f32 %v691, %v699
  %v702 = vtanh.pop %v701
  %704 = vrot.lane.b32.xlu0 %v702, 32
  %v705 = vpop.permute.xlu0 %704
  %v707 = vmul.f32 %v689, %v705
  %v708 = vld [vmem:[%s253] sm:$0xff]
  %710 = vrot.lane.b32.xlu0 %v707, 64
  %v711 = vpop.permute.xlu0 %710
  %v712 = vsel %vm258, %v711, 0
  %714 = vmatpush.msra.mxu0 0.0
  %715 = vmatpush.msra.mxu0 0.0
  %716 = vmatpush.msra.mxu0 0.0
  %717 = vmatpush.msra.mxu0 0.0
  %718 = vmatpush.msra.mxu0 0.0
  %719 = vmatpush.msra.mxu0 0.0
  %720 = vmatpush.msra.mxu0 0.0
  %721 = vmatpush.msra.mxu0 0.0
  %722 = vmatpush.msra.mxu0 0.0
  %723 = vmatpush.msra.mxu0 0.0
  %724 = vmatpush.msra.mxu0 0.0
  %725 = vmatpush.msra.mxu0 0.0
  %726 = vmatpush.msra.mxu0 %v35
  %727 = vmatpush.msra.mxu0 %v34
  %728 = vmatpush.msra.mxu0 %v33
  %729 = vmatpush.msra.mxu0 %v32
  %730 = vmatmul.f32.gmra.mxu0 %v712
  %v731 = vpop.f32.mrf.mxu0
  %v732 = vadd.f32 0.0, %v731
  %733 = vdwg.mxu0
  %v734 = vadd.f32 %v708, %v732
  %v735 = vxor.u32 %v734, 2147483648
  %v736 = vmul.f32 %v735, 1.442695
  %v737 = vpow.pop %v736
  %v738 = vadd.f32 %v737, 1.0
  %v739 = vrcp.pop %v738
  %v740 = vmul.f32 %v738, %v739
  %v741 = vsub.f32 1.0, %v740
  %v742 = vmul.f32 %v739, %v741
  %v743 = vadd.f32 %v739, %v742
  %vm744 = vweird.f32 %v738
  %vm745 = vweird.f32 %v739
  %vm746 = vmor %vm744, %vm745
  %v747 = vsel %vm746, %v739, %v743
  %v748 = vand.u32 2147483647, %v738
  %vm749 = vcmp.eq.f32.partialorder %v748, 8.507059e+37
  %v750 = vand.u32 %v738, 2147483648
  %v751 = vor.u32 1.1754944e-38, %v750
  %v752 = vsel %vm749, %v751, %v747
  %v753 = vmul.f32 1.0, %v752
  %v754 = vtanh.pop %v734
  %v755 = vmul.f32 %v753, %v701
  %757 = vrot.lane.b32.xlu0 %v754, 32
  %v758 = vpop.permute.xlu0 %757
  %v760 = vmul.f32 %v753, %v758
  %762 = vrot.lane.b32.xlu0 %v760, 32
  %v763 = vpop.permute.xlu0 %762
  %v765 = vadd.f32 %v755, %v763
  %v766 = vtanh.pop %v765
  %768 = vrot.lane.b32.xlu0 %v766, 32
  %v769 = vpop.permute.xlu0 %768
  %v771 = vmul.f32 %v753, %v769
  %773 = vrot.lane.b32.xlu0 %v771, 64
  %v774 = vpop.permute.xlu0 %773
  %776 = vst.msk [vmem:[#allocation3] sm:$0xff] %vm258, %v774
  %778 = vrot.lane.b32.xlu0 %v765, 96
  %v779 = vpop.permute.xlu0 %778
  %781 = vst.msk [vmem:[#allocation4] sm:$0xff] %vm258, %v779
  // Predicated region
  $region22: #{lstm_embedding_forward.1} parent=0 // pred_check
    %p782 = pneg %p17
  $region23: #{lstm_embedding_forward.1} parent=0 // pred_check_branch
    %784 = sbr.rel (%p782) target = $region25
  $region24: #{lstm_embedding_forward.1} parent=0 // pred_region
    %785 = vst.msk [vmem:[%s4] sm:$0xff] %vm258, %v774
  $region25: #{lstm_embedding_forward.1} parent=0 // pred_fallthru
    _
  // Predicated region
  $region26: #{lstm_embedding_forward.1} parent=0 // pred_check
    _
  $region27: #{lstm_embedding_forward.1} parent=0 // pred_check_branch
    %787 = sbr.rel (0) target = $region29
  $region28: #{lstm_embedding_forward.1} parent=0 // pred_region
    _
  $region29: #{lstm_embedding_forward.1} parent=0 // pred_fallthru
    _
  // Predicated region
  $region30: #{lstm_embedding_forward.1} parent=0 // pred_check
    _
  $region31: #{lstm_embedding_forward.1} parent=0 // pred_check_branch
    %789 = sbr.rel (0) target = $region33
  $region32: #{lstm_embedding_forward.1} parent=0 // pred_region
    _
  $region33: #{lstm_embedding_forward.1} parent=0 // pred_fallthru
    _

</llo_original>
